<compile_context>
chip_gen: v7x
topology: tpu7x:2x2x1
jax: 0.10.0
libtpu: 0.0.40
codegen_flags: <defaults>
</compile_context>

<pallas_src>
import math

import jax
import jax.numpy as jnp
from jax.experimental import pallas as pl
from jax.experimental.pallas import tpu as pltpu


_MIB = 1024 * 1024
# ~8 MiB blocks: this add is pure HBM traffic, so the only per-step cost is
# the ~0.35 us pipeline overhead; 8 MiB keeps it <3% of DMA time on v6e and
# ~5-7% on v7x.  4x block (x + out, double-buffered) + pe stays under the
# 48 MiB vmem_limit we request (< v7x's 64 MiB physical VMEM).
_TARGET_BLOCK_BYTES = 8 * _MIB
_VMEM_LIMIT_CAP = 48 * _MIB


def make_positional_encoding(channel: int, joint_num: int) -> jnp.ndarray:
    """Reproduce the PyTorch buffer: shape (1, channel, joint_num), float32."""
    assert channel % 2 == 0, "PositionalEncoding requires an even channel count"
    position = jnp.arange(joint_num, dtype=jnp.float32)[:, None]          # (J, 1)
    div_term = jnp.exp(
        jnp.arange(0, channel, 2, dtype=jnp.float32)
        * -(math.log(10000.0) / channel)
    )                                                                     # (C/2,)
    angles = position * div_term                                          # (J, C/2)
    pe = jnp.zeros((joint_num, channel), dtype=jnp.float32)
    pe = pe.at[:, 0::2].set(jnp.sin(angles))
    pe = pe.at[:, 1::2].set(jnp.cos(angles))
    pe = jnp.transpose(pe, (1, 0))[None, :, :]                            # (1, C, J)
    return pe


def _add_pe_kernel(x_ref, pe_ref, o_ref):
    # x_ref:  (bt, lane_tile) tile of the flattened (B, C*J) input
    # pe_ref: (1,  lane_tile) positional-encoding slab (broadcast over bt)
    # o_ref:  (bt, lane_tile) output tile
    o_ref[...] = (x_ref[...] + pe_ref[...]).astype(o_ref.dtype)


def positional_encoding_forward(
    x: jnp.ndarray,
    pe: jnp.ndarray,
    *,
    compute_in_x_dtype: bool = False,
    in_place: bool = False,
) -> jnp.ndarray:
    """x: (B, C, J), pe: (1, C, J)  ->  (B, C, J)."""
    B, C, J = x.shape
    assert pe.shape == (1, C, J)
    CJ = C * J

    if compute_in_x_dtype:
        # Deliberate deviation from torch promotion: keep everything in
        # x.dtype (e.g. bf16) to halve write-back bytes for this mem-bound add.
        out_dtype = x.dtype
        pe = pe.astype(x.dtype)
    else:
        out_dtype = jnp.result_type(x.dtype, pe.dtype)   # matches torch x + pe

    # Lane-dense, contiguous (hence free) reshapes.
    x2 = x.reshape(B, CJ)
    pe2 = pe.reshape(1, CJ)

    in_item = jnp.dtype(x.dtype).itemsize
    out_item = jnp.dtype(out_dtype).itemsize
    pe_item = jnp.dtype(pe2.dtype).itemsize
    max_item = max(in_item, out_item)

    # ---- lane (last-dim) tiling -------------------------------------------
    # Normally the full C*J row is one lane-dense block.  If even an 8-row
    # block would exceed the block budget, tile the lane dim in multiples of
    # 128 so stores stay unmasked vst and VMEM stays bounded.
    if 8 * CJ * max_item <= _TARGET_BLOCK_BYTES or CJ % 128 != 0:
        lane_tile = CJ
    else:
        lane_tile = max(128, (_TARGET_BLOCK_BYTES // (8 * max_item) // 128) * 128)
        lane_tile = min(lane_tile, CJ)
    lane_grid = pl.cdiv(CJ, lane_tile)

    # ---- batch (sublane) tiling -------------------------------------------
    row_bytes = max(lane_tile * max_item, 1)
    bt = _TARGET_BLOCK_BYTES // row_bytes
    if bt >= B:
        # One block would cover the whole batch.  v7x has 2 TensorCores, so a
        # 1-step parallel grid idles a core: split into 2 steps when the
        # halves are still big enough (>=1 MiB) to amortize step overhead.
        half = (((B + 1) // 2 + 7) // 8) * 8
        if B >= 16 and half < B and half * row_bytes >= 1 * _MIB:
            bt = half
        else:
            bt = B                       # full extent: second-last dim rule ok
    else:
        bt = max(8, (bt // 8) * 8)       # sublane dim multiple of 8
    batch_grid = pl.cdiv(B, bt)

    # ---- VMEM budget --------------------------------------------------------
    block_in = bt * lane_tile * in_item
    block_out = bt * lane_tile * out_item
    pe_bytes = lane_tile * pe_item
    vmem_limit = min(
        _VMEM_LIMIT_CAP,
        max(16 * _MIB, 2 * (block_in + block_out) + 2 * pe_bytes + 2 * _MIB),
    )

    aliases = {}
    if in_place and x2.dtype == jnp.dtype(out_dtype):
        aliases = {0: 0}                 # reuse x's HBM buffer for the output

    out2 = pl.pallas_call(
        _add_pe_kernel,
        out_shape=jax.ShapeDtypeStruct((B, CJ), out_dtype),
        grid_spec=pltpu.PrefetchScalarGridSpec(
            num_scalar_prefetch=0,
            grid=(batch_grid, lane_grid),
            in_specs=[
                # bt batch rows x lane_tile lanes per grid step.
                pl.BlockSpec((bt, lane_tile), lambda b, l: (b, l)),
                # pe: lane block only; constant along the batch axis.
                pl.BlockSpec((1, lane_tile), lambda b, l: (0, l)),
            ],
            out_specs=pl.BlockSpec((bt, lane_tile), lambda b, l: (b, l)),
        ),
        compiler_params=pltpu.CompilerParams(
            # Both axes are independent -> shardable across v7x's two TCs.
            dimension_semantics=("parallel", "parallel"),
            vmem_limit_bytes=int(vmem_limit),
        ),
        input_output_aliases=aliases,
    )(x2, pe2)

    return out2.reshape(B, C, J)


if __name__ == "__main__":
    # Module config: channel=32, joint_num=8  ->  pe shape (1, 32, 8)
    channel, joint_num, batch = 32, 8, 2

    key = jax.random.PRNGKey(0)
    x = jax.random.normal(key, (batch, channel, joint_num), dtype=jnp.float32)

    pe = make_positional_encoding(channel, joint_num)

    out = positional_encoding_forward(x, pe)
    out = jax.block_until_ready(out)

    # sanity check against plain-JAX reference (broadcast add, f32)
    ref = x + pe
    assert out.shape == x.shape
    assert out.dtype == ref.dtype
    assert jnp.allclose(out, ref, atol=1e-6), "f32 mismatch vs reference"

    # mixed-precision path: bf16 x + f32 pe promotes to f32 (torch-like)
    x_bf16 = x.astype(jnp.bfloat16)
    out_bf16 = jax.block_until_ready(positional_encoding_forward(x_bf16, pe))
    ref_bf16 = x_bf16 + pe
    assert out_bf16.dtype == ref_bf16.dtype
    assert jnp.allclose(out_bf16, ref_bf16, atol=1e-6), "bf16 mismatch vs reference"

    print("KERNEL_OK")
</pallas_src>

<mosaic_0001>
module attributes {stable_mosaic.version = 11 : i64} {
  func.func @_add_pe_kernel(%arg0: i32, %arg1: i32, %arg2: memref<2x256xf32, #tpu.memory_space<vmem>>, %arg3: memref<1x256xf32, #tpu.memory_space<vmem>>, %arg4: memref<2x256xf32, #tpu.memory_space<vmem>>) attributes {dimension_semantics = [#tpu.dimension_semantics<parallel>, #tpu.dimension_semantics<parallel>], iteration_bounds = array<i64: 1, 1>, scalar_prefetch = 0 : i64, scratch_operands = 0 : i64, tpu.core_type = #tpu.core_type<tc>, window_params = [{transform_indices = @transform_0, window_bounds = array<i64: 2, 256>}, {transform_indices = @transform_1, window_bounds = array<i64: 1, 256>}, {transform_indices = @transform_2, window_bounds = array<i64: 2, 256>}]} {
    %c0 = arith.constant 0 : index
    %c0_0 = arith.constant 0 : index
    %0 = vector.load %arg2[%c0, %c0_0] : memref<2x256xf32, #tpu.memory_space<vmem>>, vector<2x256xf32>
    %c0_1 = arith.constant 0 : index
    %c0_2 = arith.constant 0 : index
    %1 = vector.load %arg3[%c0_1, %c0_2] : memref<1x256xf32, #tpu.memory_space<vmem>>, vector<1x256xf32>
    %2 = vector.broadcast %1 : vector<1x256xf32> to vector<2x256xf32>
    %3 = arith.addf %0, %2 : vector<2x256xf32>
    %c0_3 = arith.constant 0 : index
    %c0_4 = arith.constant 0 : index
    %4 = vector.load %arg4[%c0_3, %c0_4] : memref<2x256xf32, #tpu.memory_space<vmem>>, vector<2x256xf32>
    tpu.vector_store %arg4[%c0_3, %c0_4], %3 {strides = array<i32>} : memref<2x256xf32, #tpu.memory_space<vmem>>, vector<2x256xf32>,
    return
  }
  func.func @transform_0(%arg0: i32, %arg1: i32) -> (i32, i32) {
    %c0_i32 = arith.constant 0 : i32
    return %arg0, %arg1 : i32, i32
  }
  func.func @transform_1(%arg0: i32, %arg1: i32) -> (i32, i32) {
    %c0_i32 = arith.constant 0 : i32
    %c0_i32_0 = arith.constant 0 : i32
    return %c0_i32, %arg1 : i32, i32
  }
  func.func @transform_2(%arg0: i32, %arg1: i32) -> (i32, i32) {
    %c0_i32 = arith.constant 0 : i32
    return %arg0, %arg1 : i32, i32
  }
}

</mosaic_0001>

<llo_original>
// kernel: tpu_custom_call.1
$region0: #{tpu_custom_call.1}
  #allocation0 [shape = 'u32[]', space=smem, size = 0x4, offset = 0x4, fixed_abs, tag = 'smem constant byte address 0x4 - core index']
  #allocation1 [shape = 'u32[144,128]{1,0:T(1,128)}', space=vmem, size = 0x12000, scoped, tag = 'internal scratch']
  %s0 = inlined_call_operand.hbm [shape: f32[2,256], index: 0, kind: input, shape index: {}]
  %s1 = inlined_call_operand.vmem [shape: f32[1,256], index: 1, kind: input, shape index: {}]
  %s2 = inlined_call_operand.hbm [shape: f32[2,256], index: 2, kind: output, shape index: {}]
  %s3 = sld [smem:[#allocation0]]
  $region22: #{tpu_custom_call.1} parent=0
    _
  %s5 = ssub.s32 1, %s3
  %s6 = scalar_select 0, %s5, %s3
  $region1: #{tpu_custom_call.1} parent=0
    #allocation2 [shape = 'u8[2048]{0}', space=vmem, size = 0x800, scoped, tag = 'input window, operand 0, single buffered']
    #allocation3 [shape = 's32[1]{0}', space=sflag, size = 0x4, scoped, tag = 'scoped memory for tpu_custom_call.1']
    #allocation4 [shape = 's32[1]{0}', space=sflag, size = 0x4, scoped, tag = 'scoped memory for tpu_custom_call.1']
    #allocation5 [shape = 'u8[2048]{0}', space=vmem, size = 0x800, scoped, tag = 'output window, operand 0, single buffered']
    %7 = vsyncpa [#allocation3], 0
    %8 = vsyncpa [#allocation4], 0
    // Predicated region
    $region2: #{tpu_custom_call.1} parent=1 // pred_check
      _
    $region3: #{tpu_custom_call.1} parent=1 // pred_check_branch
      %10 = sbr.rel (0) target = $region5
    $region4: #{tpu_custom_call.1} parent=1 // pred_region
      %s12 = ssub.s32 64, 64
      %13 = vsyncadd [#allocation3], %s12
      %s15 = sshll.u32 [#allocation2], 4
      %s16 = int_to_ptr.vmem [resolvable:$true] %s15
      %18 = dma.hbm_to_vmem [thread:$0]  %s0, 64, %s16, [#allocation3]
    $region5: #{tpu_custom_call.1} parent=1 // pred_fallthru
      _
    // Predicated region
    $region6: #{tpu_custom_call.1} parent=1 // pred_check
      _
    $region7: #{tpu_custom_call.1} parent=1 // pred_check_branch
      %20 = sbr.rel (0) target = $region9
    $region8: #{tpu_custom_call.1} parent=1 // pred_region
      _
    $region9: #{tpu_custom_call.1} parent=1 // pred_fallthru
      _
    // Predicated region
    $region10: #{tpu_custom_call.1} parent=1 // pred_check
      _
    $region11: #{tpu_custom_call.1} parent=1 // pred_check_branch
      %22 = sbr.rel (0) target = $region13
    $region12: #{tpu_custom_call.1} parent=1 // pred_region
      %23 = dma.done [#allocation3], 64
    $region13: #{tpu_custom_call.1} parent=1 // pred_fallthru
      _
    %v24 = vld [vmem:[#allocation2] sm:$0xf]
    %v25 = vld [vmem:[%s1] sm:$0x3]
    %v27 = vlaneseq
    %v28 = vshrl.u32 %v27, 7
    %v29 = vsub.s32 0, %v28
    %v30 = vrot.slane %v25, %v29
    %v31 = vlaneseq
    %v32 = vshrl.u32 %v31, 7
    %v33 = vsub.s32 1, %v32
    %v34 = vrot.slane %v25, %v33
    %v35 = vcombine.low %v30, %v34
    %v37 = vunpack.c.l.s4 1983009808
    %v38 = vunpack.c.0.s8 %v37
    %v39 = vlaneseq
    %v40 = vshrl.u32 %v39, 7
    %v41 = vsub.s32 %v38, %v40
    %v42 = vrot.slane %v35, %v41
    %v44 = vadd.f32 %v24, %v42
    %45 = vst [vmem:[#allocation5] sm:$0xf] %v44
    // Predicated region
    $region14: #{tpu_custom_call.1} parent=1 // pred_check
      _
    $region15: #{tpu_custom_call.1} parent=1 // pred_check_branch
      %47 = sbr.rel (0) target = $region17
    $region16: #{tpu_custom_call.1} parent=1 // pred_region
      %s49 = ssub.s32 64, 64
      %50 = vsyncadd [#allocation4], %s49
      %s52 = sshll.u32 [#allocation5], 4
      %s53 = int_to_ptr.vmem [resolvable:$true] %s52
      %55 = dma.vmem_to_hbm [thread:$0]  %s53, 64, %s2, [#allocation4]
    $region17: #{tpu_custom_call.1} parent=1 // pred_fallthru
      _
    // Predicated region
    $region18: #{tpu_custom_call.1} parent=1 // pred_check
      _
    $region19: #{tpu_custom_call.1} parent=1 // pred_check_branch
      %57 = sbr.rel (0) target = $region21
    $region20: #{tpu_custom_call.1} parent=1 // pred_region
      %58 = dma.done [#allocation4], 64
    $region21: #{tpu_custom_call.1} parent=1 // pred_fallthru
      _
    %59 = vsyncpa [#allocation3], 1
    %60 = vsyncpa [#allocation4], 1

</llo_original>
